<compile_context>
chip_gen: v6e
topology: v6e:2x2x1
jax: 0.10.0
libtpu: 0.0.40
codegen_flags: <defaults>
</compile_context>

<pallas_src>
import math

import jax
import jax.numpy as jnp
from jax.experimental import pallas as pl
from jax.experimental.pallas import tpu as pltpu


def _round_up(a, b):
    return ((a + b - 1) // b) * b


def _num_tensorcores():
    """Best-effort TensorCores-per-chip detection (v7x: 2, v5e/v6e: 1)."""
    try:
        kind = (jax.devices()[0].device_kind or "").lower()
    except Exception:
        return 1
    return 2 if "v7" in kind else 1


def _packing_factor(rows, dim):
    """Rows packed per 'super row' so the lane (last) dim is a multiple of 128."""
    if dim % 128 == 0:
        return 1
    L = dim * 128 // math.gcd(dim, 128)  # lcm(dim, 128)
    g = L // dim
    if L <= 512 and rows % g == 0:
        return g
    # Correct fallback: lane-sparse stores, but no pad/slice HBM copies in the wrapper.
    return 1


def _choose_tm(rows_packed, L, itemsize):
    """Packed-row tile size.

    Live pipelined bytes ~= 2 bufs x {x, res, out} x tm x L x itemsize plus the f32
    logit/gate intermediates (~2 x tm x L x 4 B).  A ~16 MiB budget keeps tiles at or
    above the ~85%-of-HBM-roofline size while fitting comfortably inside v7x's 64 MiB
    VMEM (v5e/v6e have 128 MiB).
    """
    budget = 16 * 1024 * 1024
    bytes_per_row = 6 * L * itemsize + 8 * L
    tm = max(32, min(4096, (budget // bytes_per_row) // 32 * 32))
    if tm >= rows_packed:
        # Whole array in one block ("equal full dim" is always a legal block shape),
        # unless a 2-TensorCore chip gets a real 2x from splitting a large input.
        if _num_tensorcores() >= 2 and rows_packed >= 2048:
            tm = _round_up(pl.cdiv(rows_packed, 2), 32)
        else:
            return rows_packed
    return tm


def _gated_residual_kernel(x_ref, r_ref, wa_ref, wb_ref, o_ref):
    x = x_ref[...]                      # (tm, L), native dtype
    r = r_ref[...]                      # (tm, L)

    # Gate logit in f32: exactly two MXU passes.  When rows are packed (g > 1) the
    # segment->lane expansion is already folded into the (L, L) weights; when g == 1
    # the weights are (dim, 1) and the gate broadcasts over lanes below.
    logit = (
        jnp.dot(x, wa_ref[...], preferred_element_type=jnp.float32)
        + jnp.dot(r, wb_ref[...], preferred_element_type=jnp.float32)
    )
    gate = jax.nn.sigmoid(logit).astype(x.dtype)   # (tm, L) or (tm, 1)

    # out = x*g + r*(1-g) == r + (x - r)*g   (VPU; (tm,1) gate lane-broadcasts for free)
    o_ref[...] = (r + (x - r) * gate).astype(o_ref.dtype)


def gated_residual(x, res, weight):
    """x, res: (..., dim); weight: (3*dim, 1) as in nn.Linear(dim*3, 1, bias=False)."""
    assert x.shape == res.shape
    dim = x.shape[-1]
    assert weight.shape == (3 * dim, 1)

    rows = 1
    for s in x.shape[:-1]:
        rows *= s

    # ---- Fold the concat-linear:  [x, r, x-r] @ W == x@(W1+W3) + r@(W2-W3) ----
    w_x = weight[0 * dim:1 * dim, 0]
    w_r = weight[1 * dim:2 * dim, 0]
    w_d = weight[2 * dim:3 * dim, 0]
    wa = w_x + w_d                      # pairs with x
    wb = w_r - w_d                      # pairs with res

    # ---- Lane-dense packing (no pad / no slice) ----
    g = _packing_factor(rows, dim)
    L = g * dim

    if g == 1:
        wa_k = wa.reshape(dim, 1).astype(x.dtype)
        wb_k = wb.reshape(dim, 1).astype(x.dtype)
        xp = x.reshape(rows, dim)
        rp = res.reshape(rows, dim)
    else:
        # Block-diagonal weights with the segment->lane expansion pre-folded in:
        #   WA[l, m] = wa[l % dim] if l//dim == m//dim else 0
        # so logit_full[:, m] is the segment-(m//dim) logit replicated over its dim lanes
        # (sigmoid after expansion == expansion after sigmoid for constant segments).
        eye = jnp.eye(g, dtype=wa.dtype)
        wa_k = jnp.kron(eye, jnp.broadcast_to(wa[:, None], (dim, dim))).astype(x.dtype)
        wb_k = jnp.kron(eye, jnp.broadcast_to(wb[:, None], (dim, dim))).astype(x.dtype)
        xp = x.reshape(rows // g, L)
        rp = res.reshape(rows // g, L)

    rows_packed = rows // g
    itemsize = jnp.dtype(x.dtype).itemsize
    tm = _choose_tm(rows_packed, L, itemsize)
    n_blocks = pl.cdiv(rows_packed, tm)

    gate_cols = 1 if g == 1 else L
    cost = pl.CostEstimate(
        flops=rows_packed * (4 * L * gate_cols + 4 * L),
        transcendentals=rows_packed * gate_cols,
        bytes_accessed=3 * rows * dim * itemsize,
    )

    out_packed = pl.pallas_call(
        _gated_residual_kernel,
        out_shape=jax.ShapeDtypeStruct((rows_packed, L), x.dtype),
        grid=(n_blocks,),
        in_specs=[
            pl.BlockSpec((tm, L), lambda i: (i, 0)),      # x rows (packed)
            pl.BlockSpec((tm, L), lambda i: (i, 0)),      # res rows (packed)
            pl.BlockSpec(wa_k.shape, lambda i: (0, 0)),   # folded weight for x
            pl.BlockSpec(wb_k.shape, lambda i: (0, 0)),   # folded weight for res
        ],
        out_specs=pl.BlockSpec((tm, L), lambda i: (i, 0)),
        compiler_params=pltpu.CompilerParams(
            dimension_semantics=("parallel",),
            vmem_limit_bytes=48 * 1024 * 1024,
        ),
        cost_estimate=cost,
    )(xp, rp, wa_k, wb_k)

    # Pure (contiguous) reshape back — no slice, no copy.
    return out_packed.reshape(x.shape)


def gated_residual_ref(x, res, weight):
    gate_in = jnp.concatenate([x, res, x - res], axis=-1)
    gate = jax.nn.sigmoid(gate_in @ weight)
    return x * gate + res * (1.0 - gate)


if __name__ == "__main__":
    key = jax.random.PRNGKey(0)

    def make_case(lead, dim, dtype, k):
        k1, k2, k3 = jax.random.split(k, 3)
        x = jax.random.normal(k1, lead + (dim,), dtype=jnp.float32).astype(dtype)
        r = jax.random.normal(k2, lead + (dim,), dtype=jnp.float32).astype(dtype)
        bound = 1.0 / (3 * dim) ** 0.5
        w = jax.random.uniform(k3, (3 * dim, 1), minval=-bound, maxval=bound,
                               dtype=jnp.float32)
        return x, r, w

    def check(lead, dim, dtype, k, atol, rtol):
        x, r, w = make_case(lead, dim, dtype, k)
        out = jax.block_until_ready(gated_residual(x, r, w))
        ref = gated_residual_ref(x.astype(jnp.float32), r.astype(jnp.float32), w)
        assert out.shape == x.shape
        assert jnp.allclose(out.astype(jnp.float32), ref, atol=atol, rtol=rtol), (
            f"mismatch vs reference: lead={lead} dim={dim} dtype={dtype}")

    k0, k1, k2, k3, k4 = jax.random.split(key, 5)
    check((2, 8), 32, jnp.float32, k0, 1e-4, 1e-4)      # packed path (g=4, L=128)
    check((3, 7), 32, jnp.float32, k1, 1e-4, 1e-4)      # ragged rows -> g=1 fallback, no pad
    check((2, 8), 128, jnp.float32, k2, 1e-4, 1e-4)     # g=1, per-row gate lane broadcast
    check((2, 8), 96, jnp.float32, k3, 1e-4, 1e-4)      # lcm packing (g=4, L=384)
    check((8, 2200), 32, jnp.float32, k4, 1e-4, 1e-4)   # multi-block grid + masked tail block
    check((2, 8), 128, jnp.bfloat16, k2, 5e-2, 5e-2)    # bf16 path (gate at bf16 precision)

    print("KERNEL_OK")
</pallas_src>

<mosaic_0001>
module attributes {stable_mosaic.version = 11 : i64} {
  func.func @_gated_residual_kernel(%arg0: i32, %arg1: memref<4x128xf32, #tpu.memory_space<vmem>>, %arg2: memref<4x128xf32, #tpu.memory_space<vmem>>, %arg3: memref<128x128xf32, #tpu.memory_space<vmem>>, %arg4: memref<128x128xf32, #tpu.memory_space<vmem>>, %arg5: memref<4x128xf32, #tpu.memory_space<vmem>>) attributes {dimension_semantics = [#tpu.dimension_semantics<parallel>], iteration_bounds = array<i64: 1>, scalar_prefetch = 0 : i64, scratch_operands = 0 : i64, tpu.core_type = #tpu.core_type<tc>, window_params = [{transform_indices = @transform_0, window_bounds = array<i64: 4, 128>}, {transform_indices = @transform_1, window_bounds = array<i64: 4, 128>}, {pipeline_mode = #tpu.pipeline_mode<synchronous>, transform_indices = @transform_2, window_bounds = array<i64: 128, 128>}, {pipeline_mode = #tpu.pipeline_mode<synchronous>, transform_indices = @transform_3, window_bounds = array<i64: 128, 128>}, {transform_indices = @transform_4, window_bounds = array<i64: 4, 128>}]} {
    %c0 = arith.constant 0 : index
    %c0_0 = arith.constant 0 : index
    %0 = vector.load %arg1[%c0, %c0_0] : memref<4x128xf32, #tpu.memory_space<vmem>>, vector<4x128xf32>
    %c0_1 = arith.constant 0 : index
    %c0_2 = arith.constant 0 : index
    %1 = vector.load %arg2[%c0_1, %c0_2] : memref<4x128xf32, #tpu.memory_space<vmem>>, vector<4x128xf32>
    %c0_3 = arith.constant 0 : index
    %c0_4 = arith.constant 0 : index
    %2 = vector.load %arg3[%c0_3, %c0_4] : memref<128x128xf32, #tpu.memory_space<vmem>>, vector<128x128xf32>
    %cst = arith.constant dense<0.000000e+00> : vector<4x128xf32>
    %3 = tpu.matmul %0, %2, %cst {dimension_numbers = #tpu.dot_dimension_numbers<[1], [0], [0], [1], [0, 0, 1, 1], [], []>} : vector<4x128xf32>, vector<128x128xf32>, vector<4x128xf32> -> vector<4x128xf32>
    %c0_5 = arith.constant 0 : index
    %c0_6 = arith.constant 0 : index
    %4 = vector.load %arg4[%c0_5, %c0_6] : memref<128x128xf32, #tpu.memory_space<vmem>>, vector<128x128xf32>
    %cst_7 = arith.constant dense<0.000000e+00> : vector<4x128xf32>
    %5 = tpu.matmul %1, %4, %cst_7 {dimension_numbers = #tpu.dot_dimension_numbers<[1], [0], [0], [1], [0, 0, 1, 1], [], []>} : vector<4x128xf32>, vector<128x128xf32>, vector<4x128xf32> -> vector<4x128xf32>
    %6 = arith.addf %3, %5 : vector<4x128xf32>
    %7 = arith.negf %6 : vector<4x128xf32>
    %8 = math.exp %7 : vector<4x128xf32>
    %cst_8 = arith.constant 1.000000e+00 : f32
    %9 = vector.broadcast %cst_8 : f32 to vector<4x128xf32>
    %10 = arith.addf %9, %8 : vector<4x128xf32>
    %11 = arith.divf %9, %10 : vector<4x128xf32>
    %12 = arith.subf %0, %1 : vector<4x128xf32>
    %13 = arith.mulf %12, %11 : vector<4x128xf32>
    %14 = arith.addf %1, %13 : vector<4x128xf32>
    %c0_9 = arith.constant 0 : index
    %c0_10 = arith.constant 0 : index
    %15 = vector.load %arg5[%c0_9, %c0_10] : memref<4x128xf32, #tpu.memory_space<vmem>>, vector<4x128xf32>
    tpu.vector_store %arg5[%c0_9, %c0_10], %14 {strides = array<i32>} : memref<4x128xf32, #tpu.memory_space<vmem>>, vector<4x128xf32>,
    return
  }
  func.func @transform_0(%arg0: i32) -> (i32, i32) {
    %c0_i32 = arith.constant 0 : i32
    %c0_i32_0 = arith.constant 0 : i32
    return %arg0, %c0_i32 : i32, i32
  }
  func.func @transform_1(%arg0: i32) -> (i32, i32) {
    %c0_i32 = arith.constant 0 : i32
    %c0_i32_0 = arith.constant 0 : i32
    return %arg0, %c0_i32 : i32, i32
  }
  func.func @transform_2(%arg0: i32) -> (i32, i32) {
    %c0_i32 = arith.constant 0 : i32
    %c0_i32_0 = arith.constant 0 : i32
    %c0_i32_1 = arith.constant 0 : i32
    return %c0_i32, %c0_i32_0 : i32, i32
  }
  func.func @transform_3(%arg0: i32) -> (i32, i32) {
    %c0_i32 = arith.constant 0 : i32
    %c0_i32_0 = arith.constant 0 : i32
    %c0_i32_1 = arith.constant 0 : i32
    return %c0_i32, %c0_i32_0 : i32, i32
  }
  func.func @transform_4(%arg0: i32) -> (i32, i32) {
    %c0_i32 = arith.constant 0 : i32
    %c0_i32_0 = arith.constant 0 : i32
    return %arg0, %c0_i32 : i32, i32
  }
}

</mosaic_0001>

<llo_original>
// kernel: tpu_custom_call.1
$region0: #{tpu_custom_call.1}
  #allocation0 [shape = 'u32[]', space=smem, size = 0x4, offset = 0x4, fixed_abs, tag = 'smem constant byte address 0x4 - core index']
  #allocation1 [shape = 'u32[144,128]{1,0:T(1,128)}', space=vmem, size = 0x12000, scoped, tag = 'internal scratch']
  %s0 = inlined_call_operand.hbm [shape: f32[4,128], index: 0, kind: input, shape index: {}]
  %s1 = inlined_call_operand.hbm [shape: f32[4,128], index: 1, kind: input, shape index: {}]
  %s2 = inlined_call_operand.hbm [shape: f32[128,128], index: 2, kind: input, shape index: {}]
  %s3 = inlined_call_operand.hbm [shape: f32[128,128], index: 3, kind: input, shape index: {}]
  %s4 = inlined_call_operand.hbm [shape: f32[4,128], index: 4, kind: output, shape index: {}]
  %s5 = sld [smem:[#allocation0]]
  $region42: #{tpu_custom_call.1} parent=0
    _
  %s7 = ssub.s32 1, %s5
  %s8 = scalar_select 0, %s7, %s5
  $region1: #{tpu_custom_call.1} parent=0
    #allocation2 [shape = 'u8[2048]{0}', space=vmem, size = 0x800, scoped, tag = 'input window, operand 0, single buffered']
    #allocation3 [shape = 's32[1]{0}', space=sflag, size = 0x4, scoped, tag = 'scoped memory for tpu_custom_call.1']
    #allocation4 [shape = 's32[1]{0}', space=sflag, size = 0x4, scoped, tag = 'scoped memory for tpu_custom_call.1']
    #allocation5 [shape = 'u8[2048]{0}', space=vmem, size = 0x800, scoped, tag = 'input window, operand 1, single buffered']
    #allocation6 [shape = 's32[1]{0}', space=sflag, size = 0x4, scoped, tag = 'scoped memory for tpu_custom_call.1']
    #allocation7 [shape = 'u8[65536]{0}', space=vmem, size = 0x10000, scoped, tag = 'input window, operand 2, single buffered']
    #allocation8 [shape = 'u8[65536]{0}', space=vmem, size = 0x10000, scoped, tag = 'input window, operand 3, single buffered']
    #allocation9 [shape = 's32[1]{0}', space=sflag, size = 0x4, scoped, tag = 'scoped memory for tpu_custom_call.1']
    #allocation10 [shape = 'u8[2048]{0}', space=vmem, size = 0x800, scoped, tag = 'output window, operand 0, single buffered']
    %9 = vsyncpa [#allocation3], 0
    %10 = vsyncpa [#allocation6], 0
    %11 = vsyncpa [#allocation9], 0
    %12 = vsyncpa [#allocation4], 0
    // Predicated region
    $region2: #{tpu_custom_call.1} parent=1 // pred_check
      _
    $region3: #{tpu_custom_call.1} parent=1 // pred_check_branch
      %14 = sbr.rel (0) target = $region5
    $region4: #{tpu_custom_call.1} parent=1 // pred_region
      %s16 = ssub.s32 64, 64
      %17 = vsyncadd [#allocation3], %s16
      %s19 = sshll.u32 [#allocation2], 4
      %s20 = int_to_ptr.vmem [resolvable:$true] %s19
      %22 = dma.hbm_to_vmem [thread:$0]  %s0, 64, %s20, [#allocation3]
    $region5: #{tpu_custom_call.1} parent=1 // pred_fallthru
      _
    // Predicated region
    $region6: #{tpu_custom_call.1} parent=1 // pred_check
      _
    $region7: #{tpu_custom_call.1} parent=1 // pred_check_branch
      %24 = sbr.rel (0) target = $region9
    $region8: #{tpu_custom_call.1} parent=1 // pred_region
      %s26 = ssub.s32 64, 64
      %27 = vsyncadd [#allocation6], %s26
      %s29 = sshll.u32 [#allocation5], 4
      %s30 = int_to_ptr.vmem [resolvable:$true] %s29
      %32 = dma.hbm_to_vmem [thread:$0]  %s1, 64, %s30, [#allocation6]
    $region9: #{tpu_custom_call.1} parent=1 // pred_fallthru
      _
    // Predicated region
    $region10: #{tpu_custom_call.1} parent=1 // pred_check
      _
    $region11: #{tpu_custom_call.1} parent=1 // pred_check_branch
      %34 = sbr.rel (0) target = $region13
    $region12: #{tpu_custom_call.1} parent=1 // pred_region
      %s36 = ssub.s32 2048, 2048
      %37 = vsyncadd [#allocation6], %s36
      %s38 = sshll.u32 [#allocation7], 4
      %s39 = int_to_ptr.vmem [resolvable:$true] %s38
      %44 = dma.hbm_to_vmem [thread:$0]  %s2, 2048, %s39, [#allocation6], 128, 128, 8
    $region13: #{tpu_custom_call.1} parent=1 // pred_fallthru
      _
    // Predicated region
    $region14: #{tpu_custom_call.1} parent=1 // pred_check
      _
    $region15: #{tpu_custom_call.1} parent=1 // pred_check_branch
      %46 = sbr.rel (0) target = $region17
    $region16: #{tpu_custom_call.1} parent=1 // pred_region
      %s48 = ssub.s32 2048, 2048
      %49 = vsyncadd [#allocation9], %s48
      %s50 = sshll.u32 [#allocation8], 4
      %s51 = int_to_ptr.vmem [resolvable:$true] %s50
      %56 = dma.hbm_to_vmem [thread:$0]  %s3, 2048, %s51, [#allocation9], 128, 128, 8
    $region17: #{tpu_custom_call.1} parent=1 // pred_fallthru
      _
    // Predicated region
    $region18: #{tpu_custom_call.1} parent=1 // pred_check
      _
    $region19: #{tpu_custom_call.1} parent=1 // pred_check_branch
      %58 = sbr.rel (0) target = $region21
    $region20: #{tpu_custom_call.1} parent=1 // pred_region
      %59 = dma.done [#allocation3], 64
    $region21: #{tpu_custom_call.1} parent=1 // pred_fallthru
      _
    // Predicated region
    $region22: #{tpu_custom_call.1} parent=1 // pred_check
      _
    $region23: #{tpu_custom_call.1} parent=1 // pred_check_branch
      %61 = sbr.rel (0) target = $region25
    $region24: #{tpu_custom_call.1} parent=1 // pred_region
      %62 = dma.done [#allocation6], 64
    $region25: #{tpu_custom_call.1} parent=1 // pred_fallthru
      _
    // Predicated region
    $region26: #{tpu_custom_call.1} parent=1 // pred_check
      _
    $region27: #{tpu_custom_call.1} parent=1 // pred_check_branch
      %64 = sbr.rel (0) target = $region29
    $region28: #{tpu_custom_call.1} parent=1 // pred_region
      %65 = dma.done [#allocation6], 2048
    $region29: #{tpu_custom_call.1} parent=1 // pred_fallthru
      _
    // Predicated region
    $region30: #{tpu_custom_call.1} parent=1 // pred_check
      _
    $region31: #{tpu_custom_call.1} parent=1 // pred_check_branch
      %67 = sbr.rel (0) target = $region33
    $region32: #{tpu_custom_call.1} parent=1 // pred_region
      %68 = dma.done [#allocation9], 2048
    $region33: #{tpu_custom_call.1} parent=1 // pred_fallthru
      _
    %v69 = vld [vmem:[#allocation2] sm:$0xf]
    %v70 = vld [vmem:[#allocation5] sm:$0xf]
    %v71 = vld [vmem:[#allocation7] sm:$0xff]
    %v72 = vld [vmem:[#allocation7 + $0x8] sm:$0xff]
    %v73 = vld [vmem:[#allocation7 + $0x10] sm:$0xff]
    %v74 = vld [vmem:[#allocation7 + $0x18] sm:$0xff]
    %v75 = vld [vmem:[#allocation7 + $0x20] sm:$0xff]
    %v76 = vld [vmem:[#allocation7 + $0x28] sm:$0xff]
    %v77 = vld [vmem:[#allocation7 + $0x30] sm:$0xff]
    %v78 = vld [vmem:[#allocation7 + $0x38] sm:$0xff]
    %v79 = vld [vmem:[#allocation7 + $0x40] sm:$0xff]
    %v80 = vld [vmem:[#allocation7 + $0x48] sm:$0xff]
    %v81 = vld [vmem:[#allocation7 + $0x50] sm:$0xff]
    %v82 = vld [vmem:[#allocation7 + $0x58] sm:$0xff]
    %v83 = vld [vmem:[#allocation7 + $0x60] sm:$0xff]
    %v84 = vld [vmem:[#allocation7 + $0x68] sm:$0xff]
    %v85 = vld [vmem:[#allocation7 + $0x70] sm:$0xff]
    %v86 = vld [vmem:[#allocation7 + $0x78] sm:$0xff]
    %v87 = vld [vmem:[#allocation8] sm:$0xff]
    %v88 = vld [vmem:[#allocation8 + $0x8] sm:$0xff]
    %v89 = vld [vmem:[#allocation8 + $0x10] sm:$0xff]
    %v90 = vld [vmem:[#allocation8 + $0x18] sm:$0xff]
    %v91 = vld [vmem:[#allocation8 + $0x20] sm:$0xff]
    %v92 = vld [vmem:[#allocation8 + $0x28] sm:$0xff]
    %v93 = vld [vmem:[#allocation8 + $0x30] sm:$0xff]
    %v94 = vld [vmem:[#allocation8 + $0x38] sm:$0xff]
    %v95 = vld [vmem:[#allocation8 + $0x40] sm:$0xff]
    %v96 = vld [vmem:[#allocation8 + $0x48] sm:$0xff]
    %v97 = vld [vmem:[#allocation8 + $0x50] sm:$0xff]
    %v98 = vld [vmem:[#allocation8 + $0x58] sm:$0xff]
    %v99 = vld [vmem:[#allocation8 + $0x60] sm:$0xff]
    %v100 = vld [vmem:[#allocation8 + $0x68] sm:$0xff]
    %v101 = vld [vmem:[#allocation8 + $0x70] sm:$0xff]
    %v102 = vld [vmem:[#allocation8 + $0x78] sm:$0xff]
    %103 = vmatprep.subr.mxu0 0.0
    %104 = vmatpush1.msra.mxu0 %v102
    %105 = vmatprep.subr.mxu0 0.0
    %106 = vmatpush1.msra.mxu0 %v101
    %107 = vmatprep.subr.mxu0 0.0
    %108 = vmatpush1.msra.mxu0 %v100
    %109 = vmatprep.subr.mxu0 0.0
    %110 = vmatpush1.msra.mxu0 %v99
    %111 = vmatprep.subr.mxu0 0.0
    %112 = vmatpush1.msra.mxu0 %v98
    %113 = vmatprep.subr.mxu0 0.0
    %114 = vmatpush1.msra.mxu0 %v97
    %115 = vmatprep.subr.mxu0 0.0
    %116 = vmatpush1.msra.mxu0 %v96
    %117 = vmatprep.subr.mxu0 0.0
    %118 = vmatpush1.msra.mxu0 %v95
    %119 = vmatprep.subr.mxu0 0.0
    %120 = vmatpush1.msra.mxu0 %v94
    %121 = vmatprep.subr.mxu0 0.0
    %122 = vmatpush1.msra.mxu0 %v93
    %123 = vmatprep.subr.mxu0 0.0
    %124 = vmatpush1.msra.mxu0 %v92
    %125 = vmatprep.subr.mxu0 0.0
    %126 = vmatpush1.msra.mxu0 %v91
    %127 = vmatprep.subr.mxu0 0.0
    %128 = vmatpush1.msra.mxu0 %v90
    %129 = vmatprep.subr.mxu0 0.0
    %130 = vmatpush1.msra.mxu0 %v89
    %131 = vmatprep.subr.mxu0 0.0
    %132 = vmatpush1.msra.mxu0 %v88
    %133 = vmatprep.subr.mxu0 0.0
    %134 = vmatpush1.msra.mxu0 %v87
    %135 = vmatprep.subr.mxu0 0.0
    %136 = vmatpush2.msra.mxu0 0.0
    %137 = vmatprep.subr.mxu0 0.0
    %138 = vmatpush2.msra.mxu0 0.0
    %139 = vmatprep.subr.mxu0 0.0
    %140 = vmatpush2.msra.mxu0 0.0
    %141 = vmatprep.subr.mxu0 0.0
    %142 = vmatpush2.msra.mxu0 0.0
    %143 = vmatprep.subr.mxu0 0.0
    %144 = vmatpush2.msra.mxu0 0.0
    %145 = vmatprep.subr.mxu0 0.0
    %146 = vmatpush2.msra.mxu0 0.0
    %147 = vmatprep.subr.mxu0 0.0
    %148 = vmatpush2.msra.mxu0 0.0
    %149 = vmatprep.subr.mxu0 0.0
    %150 = vmatpush2.msra.mxu0 0.0
    %151 = vmatprep.subr.mxu0 0.0
    %152 = vmatpush2.msra.mxu0 0.0
    %153 = vmatprep.subr.mxu0 0.0
    %154 = vmatpush2.msra.mxu0 0.0
    %155 = vmatprep.subr.mxu0 0.0
    %156 = vmatpush2.msra.mxu0 0.0
    %157 = vmatprep.subr.mxu0 0.0
    %158 = vmatpush2.msra.mxu0 0.0
    %159 = vmatprep.subr.mxu0 0.0
    %160 = vmatpush2.msra.mxu0 0.0
    %161 = vmatprep.subr.mxu0 0.0
    %162 = vmatpush2.msra.mxu0 0.0
    %163 = vmatprep.subr.mxu0 0.0
    %164 = vmatpush2.msra.mxu0 0.0
    %165 = vmatprep.subr.mxu0 0.0
    %166 = vmatpush2.msra.mxu0 0.0
    %167 = vmatprep.mubr.f32.mxu0 0.0
    %168 = vmatmul.mubr.f32.gmra.mxu0 %v70
    %v169 = vpop.f32.mrf.mxu0
    %v170 = vadd.f32 0.0, %v169
    %v171 = vpop.f32.mrf.mxu0
    %172 = vdwg.mxu0
    %173 = vmatprep.subr.mxu0 0.0
    %174 = vmatpush1.msra.mxu0 %v86
    %175 = vmatprep.subr.mxu0 0.0
    %176 = vmatpush1.msra.mxu0 %v85
    %177 = vmatprep.subr.mxu0 0.0
    %178 = vmatpush1.msra.mxu0 %v84
    %179 = vmatprep.subr.mxu0 0.0
    %180 = vmatpush1.msra.mxu0 %v83
    %181 = vmatprep.subr.mxu0 0.0
    %182 = vmatpush1.msra.mxu0 %v82
    %183 = vmatprep.subr.mxu0 0.0
    %184 = vmatpush1.msra.mxu0 %v81
    %185 = vmatprep.subr.mxu0 0.0
    %186 = vmatpush1.msra.mxu0 %v80
    %187 = vmatprep.subr.mxu0 0.0
    %188 = vmatpush1.msra.mxu0 %v79
    %189 = vmatprep.subr.mxu0 0.0
    %190 = vmatpush1.msra.mxu0 %v78
    %191 = vmatprep.subr.mxu0 0.0
    %192 = vmatpush1.msra.mxu0 %v77
    %193 = vmatprep.subr.mxu0 0.0
    %194 = vmatpush1.msra.mxu0 %v76
    %195 = vmatprep.subr.mxu0 0.0
    %196 = vmatpush1.msra.mxu0 %v75
    %197 = vmatprep.subr.mxu0 0.0
    %198 = vmatpush1.msra.mxu0 %v74
    %199 = vmatprep.subr.mxu0 0.0
    %200 = vmatpush1.msra.mxu0 %v73
    %201 = vmatprep.subr.mxu0 0.0
    %202 = vmatpush1.msra.mxu0 %v72
    %203 = vmatprep.subr.mxu0 0.0
    %204 = vmatpush1.msra.mxu0 %v71
    %205 = vmatprep.subr.mxu0 0.0
    %206 = vmatpush2.msra.mxu0 0.0
    %207 = vmatprep.subr.mxu0 0.0
    %208 = vmatpush2.msra.mxu0 0.0
    %209 = vmatprep.subr.mxu0 0.0
    %210 = vmatpush2.msra.mxu0 0.0
    %211 = vmatprep.subr.mxu0 0.0
    %212 = vmatpush2.msra.mxu0 0.0
    %213 = vmatprep.subr.mxu0 0.0
    %214 = vmatpush2.msra.mxu0 0.0
    %215 = vmatprep.subr.mxu0 0.0
    %216 = vmatpush2.msra.mxu0 0.0
    %217 = vmatprep.subr.mxu0 0.0
    %218 = vmatpush2.msra.mxu0 0.0
    %219 = vmatprep.subr.mxu0 0.0
    %220 = vmatpush2.msra.mxu0 0.0
    %221 = vmatprep.subr.mxu0 0.0
    %222 = vmatpush2.msra.mxu0 0.0
    %223 = vmatprep.subr.mxu0 0.0
    %224 = vmatpush2.msra.mxu0 0.0
    %225 = vmatprep.subr.mxu0 0.0
    %226 = vmatpush2.msra.mxu0 0.0
    %227 = vmatprep.subr.mxu0 0.0
    %228 = vmatpush2.msra.mxu0 0.0
    %229 = vmatprep.subr.mxu0 0.0
    %230 = vmatpush2.msra.mxu0 0.0
    %231 = vmatprep.subr.mxu0 0.0
    %232 = vmatpush2.msra.mxu0 0.0
    %233 = vmatprep.subr.mxu0 0.0
    %234 = vmatpush2.msra.mxu0 0.0
    %235 = vmatprep.subr.mxu0 0.0
    %236 = vmatpush2.msra.mxu0 0.0
    %237 = vmatprep.mubr.f32.mxu0 0.0
    %238 = vmatmul.mubr.f32.gmra.mxu0 %v69
    %v239 = vpop.f32.mrf.mxu0
    %v240 = vadd.f32 %v170, %v239
    %v241 = vpop.f32.mrf.mxu0
    %242 = vdwg.mxu0
    %v243 = vxor.u32 %v240, 2147483648
    %v244 = vmul.f32 %v243, 1.442695
    %v245 = vpow.pop %v244
    %v246 = vadd.f32 %v245, 1.0
    %v247 = vrcp.pop %v246
    %v248 = vmul.f32 1.0, %v247
    %v249 = vsub.f32 %v69, %v70
    %v250 = vmul.f32 %v249, %v248
    %v251 = vadd.f32 %v70, %v250
    %252 = vst [vmem:[#allocation10] sm:$0xf] %v251
    // Predicated region
    $region34: #{tpu_custom_call.1} parent=1 // pred_check
      _
    $region35: #{tpu_custom_call.1} parent=1 // pred_check_branch
      %254 = sbr.rel (0) target = $region37
    $region36: #{tpu_custom_call.1} parent=1 // pred_region
      %s256 = ssub.s32 64, 64
      %257 = vsyncadd [#allocation4], %s256
      %s259 = sshll.u32 [#allocation10], 4
      %s260 = int_to_ptr.vmem [resolvable:$true] %s259
      %262 = dma.vmem_to_hbm [thread:$0]  %s260, 64, %s4, [#allocation4]
    $region37: #{tpu_custom_call.1} parent=1 // pred_fallthru
      _
    // Predicated region
    $region38: #{tpu_custom_call.1} parent=1 // pred_check
      _
    $region39: #{tpu_custom_call.1} parent=1 // pred_check_branch
      %264 = sbr.rel (0) target = $region41
    $region40: #{tpu_custom_call.1} parent=1 // pred_region
      %265 = dma.done [#allocation4], 64
    $region41: #{tpu_custom_call.1} parent=1 // pred_fallthru
      _
    %266 = vsyncpa [#allocation3], 1
    %267 = vsyncpa [#allocation6], 1
    %268 = vsyncpa [#allocation9], 1
    %269 = vsyncpa [#allocation4], 1

</llo_original>
